<compile_context>
chip_gen: v7x
topology: tpu7x:2x2x1
jax: 0.10.0
libtpu: 0.0.40
codegen_flags: <defaults>
</compile_context>

<pallas_src>
import functools

import jax
import jax.numpy as jnp
from jax.experimental import pallas as pl
from jax.experimental.pallas import tpu as pltpu


def _rup(a, m):
    return (a + m - 1) // m * m


def _cdiv(a, b):
    return (a + b - 1) // b


def _physical_vmem_bytes(default=64 << 20):
    """Per-core VMEM capacity; conservative 64 MiB (v7x) fallback."""
    try:
        return int(getattr(pltpu.get_tpu_info(), "vmem_capacity_bytes", default))
    except Exception:
        return default


# ---------------------------------------------------------------------------
# Pallas kernel: one (token-tile, DH-block) grid step
#   grid axis 0: token-row tiles ("parallel" -> megacore shard)
#   grid axis 1: DH blocks of the MLP hidden dim ("arbitrary", accumulated)
# ---------------------------------------------------------------------------
def _encoder_kernel(patches_ref,   # [TM, PDIMp]        bf16  token patches (padded)
                    w_emb_ref,     # [PDIMp, Dp]        bf16  patch-embedding weight
                    dpack_ref,     # [8, Dp]            f32   rows: b_emb, gamma, beta, b2
                    b1_ref,        # [n_dh, 1, dh_blk]  f32   MLP-in bias (all blocks resident)
                    w1_ref,        # [Dp, dh_blk]       bf16  MLP-in weight block
                    w2_ref,        # [dh_blk, Dp]       bf16  MLP-out weight block
                    out_ref,       # [TM, Dp]           bf16  token features (padded)
                    y_sc,          # VMEM [TM, Dp]      bf16  post-LN activations
                    acc_sc,        # VMEM [TM, Dp]      f32   MLP + residual accumulator
                    *, d_valid: float, eps: float):
    k = pl.program_id(1)

    # ---- first DH block of this token tile: embed + LayerNorm, init acc ----
    @pl.when(k == 0)
    def _init():
        # patch embedding (bf16 MXU, f32 accumulate). Padded PDIM/D columns of
        # w_emb and b_emb are zero, so padded feature columns of h are exactly 0.
        h = jnp.dot(patches_ref[...], w_emb_ref[...],
                    preferred_element_type=jnp.float32) + dpack_ref[0:1, :]

        # one-pass LayerNorm stats over the *valid* D columns (padded cols are 0,
        # so summing over Dp equals summing over D; divide by the real D).
        inv_d = 1.0 / d_valid
        mu = jnp.sum(h, axis=-1, keepdims=True) * inv_d
        msq = jnp.sum(h * h, axis=-1, keepdims=True) * inv_d
        var = jnp.maximum(msq - mu * mu, 0.0)
        y = (h - mu) * jax.lax.rsqrt(var + eps)
        # gamma/beta are zero-padded -> padded columns of y become exactly 0.
        y = y * dpack_ref[1:2, :] + dpack_ref[2:3, :]

        y_sc[...] = y.astype(jnp.bfloat16)           # bf16 MXU operand, reused every k
        acc_sc[...] = y + dpack_ref[3:4, :]          # fold residual + b2 into f32 acc

    # ---- MLP contribution of this DH block (bf16 MXU, f32 accumulate) ----
    m = jnp.dot(y_sc[...], w1_ref[...],
                preferred_element_type=jnp.float32) + b1_ref[k]
    m = jax.nn.gelu(m)                               # tanh-approx GELU, f32 VPU/EUP
    acc_sc[...] += jnp.dot(m.astype(jnp.bfloat16), w2_ref[...],
                           preferred_element_type=jnp.float32)

    # ---- last DH block: write dense bf16 token tile ----
    @pl.when(k == pl.num_programs(1) - 1)
    def _finalize():
        out_ref[...] = acc_sc[...].astype(out_ref.dtype)


# ---------------------------------------------------------------------------
# One-time weight packing (call once, reuse across forward calls)
# ---------------------------------------------------------------------------
def prepare_encoder_params(params, *, c, patch):
    """Zero-pad feature dims to lane-dense multiples (256 when >128 to fill the
    v6e/v7x 256x256 MXU), cast MXU operands to bf16, and pack the four D-sized
    vectors into one sublane-dense (8, Dp) array."""
    pdim = c * patch * patch
    d = params["w_emb"].shape[1]
    dh = params["w1"].shape[1]
    pdimp = _rup(pdim, 128)
    dp = _rup(d, 256) if d > 128 else _rup(d, 128)
    dhp = _rup(dh, 256) if dh > 128 else _rup(dh, 128)

    bf = jnp.bfloat16
    w_emb = jnp.zeros((pdimp, dp), bf).at[:pdim, :d].set(params["w_emb"].astype(bf))
    w1 = jnp.zeros((dp, dhp), bf).at[:d, :dh].set(params["w1"].astype(bf))
    w2 = jnp.zeros((dhp, dp), bf).at[:dh, :d].set(params["w2"].astype(bf))
    b1 = jnp.zeros((dhp,), jnp.float32).at[:dh].set(params["b1"][0])
    # row 0 = b_emb, 1 = gamma, 2 = beta, 3 = b2 (padded columns stay zero).
    dpack = (jnp.zeros((8, dp), jnp.float32)
             .at[0, :d].set(params["b_emb"][0])
             .at[1, :d].set(params["gamma"][0])
             .at[2, :d].set(params["beta"][0])
             .at[3, :d].set(params["b2"][0]))
    packed = {"w_emb": w_emb, "w1": w1, "w2": w2, "b1": b1, "dpack": dpack}
    meta = {"d": d, "dh": dh, "pdim": pdim}
    return packed, meta


# ---------------------------------------------------------------------------
# VMEM footprint model + tiling selection (per-chip, VMEM-budget aware)
# ---------------------------------------------------------------------------
def _footprint_bytes(tm_, pdimp, dp, dh_blk, n_dh):
    return (2 * tm_ * pdimp * 2          # patches block (bf16, double-buffered)
            + pdimp * dp * 2             # w_emb (bf16, Buffered(1))
            + 8 * dp * 4                 # dpack (f32, Buffered(1))
            + n_dh * 8 * dh_blk * 4      # b1, sublane-padded (f32, Buffered(1))
            + 2 * dp * dh_blk * 2        # w1 block (bf16, double-buffered)
            + 2 * dh_blk * dp * 2        # w2 block (bf16, double-buffered)
            + 2 * tm_ * dp * 2           # out block (bf16, double-buffered)
            + tm_ * dp * 2               # y_sc (bf16)
            + tm_ * dp * 4)              # acc_sc (f32)


def _choose_tiling(rows, pdimp, dp, dhp, tm, dh_block, vmem_budget):
    tm_ = min(_rup(tm, 8), _rup(rows, 8))
    if rows > 8 and _rup(rows, tm_) // tm_ < 2:
        # ensure >= 2 row tiles so both TensorCores (v7x megacore) get work
        tm_ = _rup(_cdiv(rows, 2), 8)
    budget = (vmem_budget * 3) // 4      # headroom for compiler internal scratch
    g_cap = max(min(dh_block // 128, dhp // 128), 1)
    dh_blk = None
    while True:
        for g in range(g_cap, 0, -1):
            if (dhp // 128) % g:
                continue                 # dh_blk must evenly divide the padded DH
            cand = 128 * g
            if _footprint_bytes(tm_, pdimp, dp, cand, dhp // cand) <= budget:
                dh_blk = cand
                break
        if dh_blk is not None or tm_ <= 8:
            break
        tm_ = max(8, _rup(tm_ // 2, 8))  # shrink row tile and retry
    if dh_blk is None:
        dh_blk = 128
    return tm_, dh_blk


# ---------------------------------------------------------------------------
# Wrapper: patchify (bf16) + pallas_call + tiny f32 mean-pool
# ---------------------------------------------------------------------------
@functools.partial(
    jax.jit,
    static_argnames=("patch", "d", "eps", "tm", "dh_block", "vmem_budget"))
def inference_encoder_forward(x, packed, *, patch, d, eps=1e-5, tm=256,
                              dh_block=2048, vmem_budget=None):
    """x: [B, C, H, W] float32 (NCHW). packed: prepare_encoder_params() output.
    Returns z: [B, d] float32."""
    if vmem_budget is None:
        vmem_budget = _physical_vmem_bytes()

    B, C, H, W = x.shape
    assert H % patch == 0 and W % patch == 0
    th, tw = H // patch, W // patch
    T = th * tw
    rows = B * T
    PDIM = C * patch * patch

    w_emb, dpack, b1, w1, w2 = (packed["w_emb"], packed["dpack"], packed["b1"],
                                packed["w1"], packed["w2"])
    PDIMp, Dp = w_emb.shape
    DHp = w1.shape[1]
    assert PDIMp >= PDIM and Dp >= d

    TM, dh_blk = _choose_tiling(rows, PDIMp, Dp, DHp, tm, dh_block, vmem_budget)
    n_dh = DHp // dh_blk
    rows_pad = _rup(rows, TM)
    n_row = rows_pad // TM

    # NCHW -> non-overlapping P x P patch tokens; cast to bf16 BEFORE the
    # full-pass transpose to halve its HBM traffic.
    xb = x.astype(jnp.bfloat16)
    xp = xb.reshape(B, C, th, patch, tw, patch)
    xp = jnp.transpose(xp, (0, 2, 4, 1, 3, 5)).reshape(rows, PDIM)
    patches = jnp.pad(xp, ((0, rows_pad - rows), (0, PDIMp - PDIM)))

    b1_blk = b1.reshape(n_dh, 1, dh_blk)         # tiny resident constant

    fp = _footprint_bytes(TM, PDIMp, Dp, dh_blk, n_dh)
    vmem_limit = int(min(max(int(fp * 1.25) + (8 << 20), 32 << 20), vmem_budget))

    kernel = functools.partial(_encoder_kernel, d_valid=float(d), eps=float(eps))

    # constant-index inputs: single-buffered (no wasted second VMEM copy)
    def const_spec(shape):
        nd = len(shape)
        return pl.BlockSpec(shape, lambda i, k: (0,) * nd,
                            pipeline_mode=pl.Buffered(1))

    tokens = pl.pallas_call(
        kernel,
        out_shape=jax.ShapeDtypeStruct((rows_pad, Dp), jnp.bfloat16),
        grid_spec=pltpu.PrefetchScalarGridSpec(
            num_scalar_prefetch=0,
            grid=(n_row, n_dh),
            in_specs=[
                pl.BlockSpec((TM, PDIMp), lambda i, k: (i, 0)),    # patches
                const_spec((PDIMp, Dp)),                           # w_emb
                const_spec((8, Dp)),                               # packed b_emb/gamma/beta/b2
                const_spec((n_dh, 1, dh_blk)),                     # b1 (all blocks resident)
                pl.BlockSpec((Dp, dh_blk), lambda i, k: (0, k)),   # w1 (DH-streamed)
                pl.BlockSpec((dh_blk, Dp), lambda i, k: (k, 0)),   # w2 (DH-streamed)
            ],
            out_specs=pl.BlockSpec((TM, Dp), lambda i, k: (i, 0)),
            scratch_shapes=[pltpu.VMEM((TM, Dp), jnp.bfloat16),    # y (post-LN, bf16)
                            pltpu.VMEM((TM, Dp), jnp.float32)],    # MLP + residual acc
        ),
        # token-tile axis shards across TensorCores; DH axis is a resident
        # accumulation (output index map constant along it).
        compiler_params=pltpu.CompilerParams(
            dimension_semantics=("parallel", "arbitrary"),
            vmem_limit_bytes=vmem_limit),
    )(patches, w_emb, dpack, b1_blk, w1, w2)

    # tiny XLA reduce: drop padding, mean-pool tokens per image in f32 -> [B, d]
    z = tokens[:rows, :d].astype(jnp.float32).reshape(B, T, d).mean(axis=1)
    return z


# ---------------------------------------------------------------------------
# Deterministic parameter init (synthetic "_build" for the abstract encoder)
# ---------------------------------------------------------------------------
def build_params(key, *, c, patch, d, dh):
    pdim = c * patch * patch
    ks = jax.random.split(key, 4)
    scale = lambda fan_in: 1.0 / jnp.sqrt(jnp.float32(fan_in))
    return {
        "w_emb": jax.random.normal(ks[0], (pdim, d), jnp.float32) * scale(pdim),
        "b_emb": jnp.zeros((1, d), jnp.float32),
        "gamma": jnp.ones((1, d), jnp.float32),
        "beta": jnp.zeros((1, d), jnp.float32),
        "w1": jax.random.normal(ks[1], (d, dh), jnp.float32) * scale(d),
        "b1": jnp.zeros((1, dh), jnp.float32),
        "w2": jax.random.normal(ks[2], (dh, d), jnp.float32) * scale(dh),
        "b2": jnp.zeros((1, d), jnp.float32),
    }


# Pure-JAX reference (same bf16-input / f32-accumulate matmul precision and
# bf16 token write-back as the kernel, so the comparison isolates kernel /
# tiling correctness rather than mixed-precision policy).
def _reference_forward(x, params, *, patch, eps=1e-5):
    B, C, H, W = x.shape
    th, tw = H // patch, W // patch
    xp = x.astype(jnp.bfloat16).reshape(B, C, th, patch, tw, patch)
    xp = jnp.transpose(xp, (0, 2, 4, 1, 3, 5)).reshape(B, th * tw, -1)
    bf = jnp.bfloat16
    dot = lambda a, b: jnp.einsum("btk,kd->btd", a.astype(bf), b.astype(bf),
                                  preferred_element_type=jnp.float32)
    h = dot(xp, params["w_emb"]) + params["b_emb"]
    mu = h.mean(-1, keepdims=True)
    var = ((h - mu) ** 2).mean(-1, keepdims=True)
    y = (h - mu) * jax.lax.rsqrt(var + eps) * params["gamma"] + params["beta"]
    m = jax.nn.gelu(dot(y, params["w1"]) + params["b1"])
    o = dot(m, params["w2"]) + params["b2"] + y
    o = o.astype(jnp.bfloat16).astype(jnp.float32)   # kernel writes bf16 tokens
    return o.mean(axis=1)


if __name__ == "__main__":
    # Small shapes consistent with the module's forward (image encoder on NCHW).
    B, C, H, W = 2, 4, 16, 16
    PATCH, D, DH = 4, 32, 256

    key = jax.random.PRNGKey(0)
    kx, kp = jax.random.split(key)
    x = jax.random.normal(kx, (B, C, H, W), jnp.float32)
    params = build_params(kp, c=C, patch=PATCH, d=D, dh=DH)

    # one-time weight padding / bf16 packing, reused across forward calls
    packed, meta = prepare_encoder_params(params, c=C, patch=PATCH)

    # Small tiles so this tiny example exercises the multi-step
    # (token-tile x DH-block) grid and the accumulator init/finalize paths.
    z = inference_encoder_forward(x, packed, patch=PATCH, d=meta["d"],
                                  tm=16, dh_block=128)
    z = jax.block_until_ready(z)

    z_ref = _reference_forward(x, params, patch=PATCH)
    assert z.shape == (B, D)
    assert jnp.allclose(z, z_ref, atol=1e-2, rtol=1e-2), \
        float(jnp.max(jnp.abs(z - z_ref)))

    print("KERNEL_OK")
</pallas_src>

<mosaic_0001>
module attributes {stable_mosaic.version = 11 : i64} {
  func.func @_encoder_kernel(%arg0: i32, %arg1: i32, %arg2: memref<16x128xbf16, #tpu.memory_space<vmem>>, %arg3: memref<128x128xbf16, #tpu.memory_space<vmem>>, %arg4: memref<8x128xf32, #tpu.memory_space<vmem>>, %arg5: memref<2x1x128xf32, #tpu.memory_space<vmem>>, %arg6: memref<128x128xbf16, #tpu.memory_space<vmem>>, %arg7: memref<128x128xbf16, #tpu.memory_space<vmem>>, %arg8: memref<16x128xbf16, #tpu.memory_space<vmem>>, %arg9: memref<16x128xbf16, #tpu.memory_space<vmem>>, %arg10: memref<16x128xf32, #tpu.memory_space<vmem>>) attributes {dimension_semantics = [#tpu.dimension_semantics<parallel>, #tpu.dimension_semantics<arbitrary>], iteration_bounds = array<i64: 2, 2>, scalar_prefetch = 0 : i64, scratch_operands = 2 : i64, tpu.core_type = #tpu.core_type<tc>, window_params = [{transform_indices = @transform_0, window_bounds = array<i64: 16, 128>}, {pipeline_mode = #tpu.pipeline_mode<synchronous>, transform_indices = @transform_1, window_bounds = array<i64: 128, 128>}, {pipeline_mode = #tpu.pipeline_mode<synchronous>, transform_indices = @transform_2, window_bounds = array<i64: 8, 128>}, {pipeline_mode = #tpu.pipeline_mode<synchronous>, transform_indices = @transform_3, window_bounds = array<i64: 2, 1, 128>}, {transform_indices = @transform_4, window_bounds = array<i64: 128, 128>}, {transform_indices = @transform_5, window_bounds = array<i64: 128, 128>}, {transform_indices = @transform_6, window_bounds = array<i64: 16, 128>}]} {
    %c0_i32 = arith.constant 0 : i32
    %0 = arith.cmpi eq, %arg1, %c0_i32 : i32
    %1 = arith.extui %0 : i1 to i32
    %c0_i32_0 = arith.constant 0 : i32
    %2 = arith.cmpi ne, %1, %c0_i32_0 : i32
    scf.if %2 {
      %c0_18 = arith.constant 0 : index
      %c0_19 = arith.constant 0 : index
      %33 = vector.load %arg2[%c0_18, %c0_19] : memref<16x128xbf16, #tpu.memory_space<vmem>>, vector<16x128xbf16>
      %c0_20 = arith.constant 0 : index
      %c0_21 = arith.constant 0 : index
      %34 = vector.load %arg3[%c0_20, %c0_21] : memref<128x128xbf16, #tpu.memory_space<vmem>>, vector<128x128xbf16>
      %cst_22 = arith.constant dense<0.000000e+00> : vector<16x128xf32>
      %35 = tpu.matmul %33, %34, %cst_22 {dimension_numbers = #tpu.dot_dimension_numbers<[1], [0], [0], [1], [0, 0, 1, 1], [], []>} : vector<16x128xbf16>, vector<128x128xbf16>, vector<16x128xf32> -> vector<16x128xf32>
      %c0_23 = arith.constant 0 : index
      %c0_24 = arith.constant 0 : index
      %36 = vector.load %arg4[%c0_23, %c0_24] : memref<8x128xf32, #tpu.memory_space<vmem>>, vector<1x128xf32>
      %37 = vector.broadcast %36 : vector<1x128xf32> to vector<16x128xf32>
      %38 = arith.addf %35, %37 : vector<16x128xf32>
      %cst_25 = arith.constant dense<0.000000e+00> : vector<16xf32>
      %39 = vector.multi_reduction <add>, %38, %cst_25 [1] : vector<16x128xf32> to vector<16xf32>
      %40 = vector.shape_cast %39 : vector<16xf32> to vector<16x1xf32>
      %cst_26 = arith.constant 3.125000e-02 : f32
      %41 = vector.broadcast %cst_26 : f32 to vector<16x1xf32>
      %42 = arith.mulf %40, %41 : vector<16x1xf32>
      %43 = arith.mulf %38, %38 : vector<16x128xf32>
      %cst_27 = arith.constant dense<0.000000e+00> : vector<16xf32>
      %44 = vector.multi_reduction <add>, %43, %cst_27 [1] : vector<16x128xf32> to vector<16xf32>
      %45 = vector.shape_cast %44 : vector<16xf32> to vector<16x1xf32>
      %cst_28 = arith.constant 3.125000e-02 : f32
      %46 = vector.broadcast %cst_28 : f32 to vector<16x1xf32>
      %47 = arith.mulf %45, %46 : vector<16x1xf32>
      %48 = arith.mulf %42, %42 : vector<16x1xf32>
      %49 = arith.subf %47, %48 : vector<16x1xf32>
      %cst_29 = arith.constant 0.000000e+00 : f32
      %50 = vector.broadcast %cst_29 : f32 to vector<16x1xf32>
      %51 = arith.maximumf %49, %50 : vector<16x1xf32>
      %52 = vector.broadcast %42 : vector<16x1xf32> to vector<16x128xf32>
      %53 = arith.subf %38, %52 : vector<16x128xf32>
      %cst_30 = arith.constant 9.99999974E-6 : f32
      %54 = vector.broadcast %cst_30 : f32 to vector<16x1xf32>
      %55 = arith.addf %51, %54 : vector<16x1xf32>
      %56 = math.rsqrt %55 : vector<16x1xf32>
      %57 = vector.broadcast %56 : vector<16x1xf32> to vector<16x128xf32>
      %58 = arith.mulf %53, %57 : vector<16x128xf32>
      %c1 = arith.constant 1 : index
      %c0_31 = arith.constant 0 : index
      %59 = vector.load %arg4[%c1, %c0_31] : memref<8x128xf32, #tpu.memory_space<vmem>>, vector<1x128xf32>
      %60 = vector.broadcast %59 : vector<1x128xf32> to vector<16x128xf32>
      %61 = arith.mulf %58, %60 : vector<16x128xf32>
      %c2 = arith.constant 2 : index
      %c0_32 = arith.constant 0 : index
      %62 = vector.load %arg4[%c2, %c0_32] : memref<8x128xf32, #tpu.memory_space<vmem>>, vector<1x128xf32>
      %63 = vector.broadcast %62 : vector<1x128xf32> to vector<16x128xf32>
      %64 = arith.addf %61, %63 : vector<16x128xf32>
      %65 = arith.truncf %64 : vector<16x128xf32> to vector<16x128xbf16>
      %c0_33 = arith.constant 0 : index
      %c0_34 = arith.constant 0 : index
      %66 = vector.load %arg9[%c0_33, %c0_34] : memref<16x128xbf16, #tpu.memory_space<vmem>>, vector<16x128xbf16>
      tpu.vector_store %arg9[%c0_33, %c0_34], %65 {strides = array<i32>} : memref<16x128xbf16, #tpu.memory_space<vmem>>, vector<16x128xbf16>,
      %c3 = arith.constant 3 : index
      %c0_35 = arith.constant 0 : index
      %67 = vector.load %arg4[%c3, %c0_35] : memref<8x128xf32, #tpu.memory_space<vmem>>, vector<1x128xf32>
      %68 = vector.broadcast %67 : vector<1x128xf32> to vector<16x128xf32>
      %69 = arith.addf %64, %68 : vector<16x128xf32>
      %c0_36 = arith.constant 0 : index
      %c0_37 = arith.constant 0 : index
      %70 = vector.load %arg10[%c0_36, %c0_37] : memref<16x128xf32, #tpu.memory_space<vmem>>, vector<16x128xf32>
      tpu.vector_store %arg10[%c0_36, %c0_37], %69 {strides = array<i32>} : memref<16x128xf32, #tpu.memory_space<vmem>>, vector<16x128xf32>,
    } else {
    }
    %c0 = arith.constant 0 : index
    %c0_1 = arith.constant 0 : index
    %3 = vector.load %arg9[%c0, %c0_1] : memref<16x128xbf16, #tpu.memory_space<vmem>>, vector<16x128xbf16>
    %c0_2 = arith.constant 0 : index
    %c0_3 = arith.constant 0 : index
    %4 = vector.load %arg6[%c0_2, %c0_3] : memref<128x128xbf16, #tpu.memory_space<vmem>>, vector<128x128xbf16>
    %cst = arith.constant dense<0.000000e+00> : vector<16x128xf32>
    %5 = tpu.matmul %3, %4, %cst {dimension_numbers = #tpu.dot_dimension_numbers<[1], [0], [0], [1], [0, 0, 1, 1], [], []>} : vector<16x128xbf16>, vector<128x128xbf16>, vector<16x128xf32> -> vector<16x128xf32>
    %6 = arith.index_cast %arg1 : i32 to index
    %c0_4 = arith.constant 0 : index
    %c0_5 = arith.constant 0 : index
    %7 = vector.load %arg5[%6, %c0_4, %c0_5] : memref<2x1x128xf32, #tpu.memory_space<vmem>>, vector<1x1x128xf32>
    %8 = vector.shape_cast %7 : vector<1x1x128xf32> to vector<1x128xf32>
    %9 = vector.broadcast %8 : vector<1x128xf32> to vector<16x128xf32>
    %10 = arith.addf %5, %9 : vector<16x128xf32>
    %11 = arith.mulf %10, %10 : vector<16x128xf32>
    %12 = arith.mulf %10, %11 : vector<16x128xf32>
    %cst_6 = arith.constant 4.471500e-02 : f32
    %13 = vector.broadcast %cst_6 : f32 to vector<16x128xf32>
    %14 = arith.mulf %13, %12 : vector<16x128xf32>
    %15 = arith.addf %10, %14 : vector<16x128xf32>
    %cst_7 = arith.constant 0.797884583 : f32
    %16 = vector.broadcast %cst_7 : f32 to vector<16x128xf32>
    %17 = arith.mulf %16, %15 : vector<16x128xf32>
    %18 = math.tanh %17 : vector<16x128xf32>
    %cst_8 = arith.constant 1.000000e+00 : f32
    %19 = vector.broadcast %cst_8 : f32 to vector<16x128xf32>
    %20 = arith.addf %19, %18 : vector<16x128xf32>
    %cst_9 = arith.constant 5.000000e-01 : f32
    %21 = vector.broadcast %cst_9 : f32 to vector<16x128xf32>
    %22 = arith.mulf %21, %20 : vector<16x128xf32>
    %23 = arith.mulf %10, %22 : vector<16x128xf32>
    %c0_10 = arith.constant 0 : index
    %c0_11 = arith.constant 0 : index
    %24 = vector.load %arg10[%c0_10, %c0_11] : memref<16x128xf32, #tpu.memory_space<vmem>>, vector<16x128xf32>
    %25 = arith.truncf %23 : vector<16x128xf32> to vector<16x128xbf16>
    %c0_12 = arith.constant 0 : index
    %c0_13 = arith.constant 0 : index
    %26 = vector.load %arg7[%c0_12, %c0_13] : memref<128x128xbf16, #tpu.memory_space<vmem>>, vector<128x128xbf16>
    %cst_14 = arith.constant dense<0.000000e+00> : vector<16x128xf32>
    %27 = tpu.matmul %25, %26, %cst_14 {dimension_numbers = #tpu.dot_dimension_numbers<[1], [0], [0], [1], [0, 0, 1, 1], [], []>} : vector<16x128xbf16>, vector<128x128xbf16>, vector<16x128xf32> -> vector<16x128xf32>
    %28 = arith.addf %24, %27 : vector<16x128xf32>
    %c0_15 = arith.constant 0 : index
    %c0_16 = arith.constant 0 : index
    %29 = vector.load %arg10[%c0_15, %c0_16] : memref<16x128xf32, #tpu.memory_space<vmem>>, vector<16x128xf32>
    tpu.vector_store %arg10[%c0_15, %c0_16], %28 {strides = array<i32>} : memref<16x128xf32, #tpu.memory_space<vmem>>, vector<16x128xf32>,
    %c1_i32 = arith.constant 1 : i32
    %30 = arith.cmpi eq, %arg1, %c1_i32 : i32
    %31 = arith.extui %30 : i1 to i32
    %c0_i32_17 = arith.constant 0 : i32
    %32 = arith.cmpi ne, %31, %c0_i32_17 : i32
    scf.if %32 {
      %c0_18 = arith.constant 0 : index
      %c0_19 = arith.constant 0 : index
      %33 = vector.load %arg10[%c0_18, %c0_19] : memref<16x128xf32, #tpu.memory_space<vmem>>, vector<16x128xf32>
      %34 = arith.truncf %33 : vector<16x128xf32> to vector<16x128xbf16>
      %c0_20 = arith.constant 0 : index
      %c0_21 = arith.constant 0 : index
      %35 = vector.load %arg8[%c0_20, %c0_21] : memref<16x128xbf16, #tpu.memory_space<vmem>>, vector<16x128xbf16>
      tpu.vector_store %arg8[%c0_20, %c0_21], %34 {strides = array<i32>} : memref<16x128xbf16, #tpu.memory_space<vmem>>, vector<16x128xbf16>,
    } else {
    }
    return
  }
  func.func @transform_0(%arg0: i32, %arg1: i32) -> (i32, i32) {
    %c0_i32 = arith.constant 0 : i32
    %c0_i32_0 = arith.constant 0 : i32
    return %arg0, %c0_i32 : i32, i32
  }
  func.func @transform_1(%arg0: i32, %arg1: i32) -> (i32, i32) {
    %c0_i32 = arith.constant 0 : i32
    %c0_i32_0 = arith.constant 0 : i32
    %c0_i32_1 = arith.constant 0 : i32
    return %c0_i32, %c0_i32_0 : i32, i32
  }
  func.func @transform_2(%arg0: i32, %arg1: i32) -> (i32, i32) {
    %c0_i32 = arith.constant 0 : i32
    %c0_i32_0 = arith.constant 0 : i32
    %c0_i32_1 = arith.constant 0 : i32
    return %c0_i32, %c0_i32_0 : i32, i32
  }
  func.func @transform_3(%arg0: i32, %arg1: i32) -> (i32, i32, i32) {
    %c0_i32 = arith.constant 0 : i32
    %c0_i32_0 = arith.constant 0 : i32
    %c0_i32_1 = arith.constant 0 : i32
    %c0_i32_2 = arith.constant 0 : i32
    return %c0_i32, %c0_i32_0, %c0_i32_1 : i32, i32, i32
  }
  func.func @transform_4(%arg0: i32, %arg1: i32) -> (i32, i32) {
    %c0_i32 = arith.constant 0 : i32
    %c0_i32_0 = arith.constant 0 : i32
    return %c0_i32, %arg1 : i32, i32
  }
  func.func @transform_5(%arg0: i32, %arg1: i32) -> (i32, i32) {
    %c0_i32 = arith.constant 0 : i32
    %c0_i32_0 = arith.constant 0 : i32
    return %arg1, %c0_i32 : i32, i32
  }
  func.func @transform_6(%arg0: i32, %arg1: i32) -> (i32, i32) {
    %c0_i32 = arith.constant 0 : i32
    %c0_i32_0 = arith.constant 0 : i32
    return %arg0, %c0_i32 : i32, i32
  }
}

</mosaic_0001>

<llo_original>
// kernel: inference_encoder_forward.1
$region0: #{inference_encoder_forward.1}
  #allocation0 [shape = 'u32[]', space=smem, size = 0x4, offset = 0x4, fixed_abs, tag = 'smem constant byte address 0x4 - core index']
  #allocation1 [shape = 'u32[144,128]{1,0:T(1,128)}', space=vmem, size = 0x12000, scoped, tag = 'internal scratch']
  #allocation2 [shape = 'bf16[16,128]{1,0:T(16,128)(2,1)}', space=vmem, size = 0x1000, scoped, tag = 'scratch operand']
  #allocation3 [shape = 'f32[16,128]{1,0:T(8,128)}', space=vmem, size = 0x2000, scoped, tag = 'scratch operand']
  %s0 = inlined_call_operand.vmem [shape: bf16[32,128], index: 0, kind: input, shape index: {}]
  %s1 = inlined_call_operand.vmem [shape: bf16[128,128], index: 1, kind: input, shape index: {}]
  %s2 = inlined_call_operand.vmem [shape: f32[8,128], index: 2, kind: input, shape index: {}]
  %s3 = inlined_call_operand.vmem [shape: f32[2,1,128], index: 3, kind: input, shape index: {}]
  %s4 = inlined_call_operand.vmem [shape: bf16[128,256], index: 4, kind: input, shape index: {}]
  %s5 = inlined_call_operand.vmem [shape: bf16[256,128], index: 5, kind: input, shape index: {}]
  %s6 = inlined_call_operand.vmem [shape: bf16[32,128], index: 6, kind: output, shape index: {}]
  %s7 = sld [smem:[#allocation0]]
  $region106: #{inference_encoder_forward.1} parent=0
    _
  %s9 = ssub.s32 1, %s7
  %s10 = scalar_select 0, %s9, %s7
  $region1: #{inference_encoder_forward.1} parent=0
    #allocation4 [shape = 'u8[65536]{0}', space=vmem, size = 0x10000, scoped, tag = 'input window, operand 4']
    loop: start=0, step=1, limit=6
    $region2: #{inference_encoder_forward.1} parent=1 // loop_pre_header
      _
    $region3: #{inference_encoder_forward.1} parent=1 // loop_header
      %s12 = sphi 0, %s16
      %p13 = scmp.ge.s32.totalorder %s12, 6
      %s19 = sphi 0, %s31
      %s20 = sphi 0, %s27
      %s21 = sphi 0, %s19
      %s22 = sphi 0, %s20
      %s23 = sphi 0, %s21
      %s24 = sphi 0, %s22
      %s34 = sphi 0, %s36
      %s37 = sphi 0, %s34
      %s38 = sphi 0, %s37
      %s54 = sphi 0, %s38
      %s58 = sphi 0, %s58
      %s60 = sphi 0, %s58
      %s61 = sphi 0, %s60
      %s75 = sphi 0, %s61
      %s79 = sphi 0, %s79
      %s81 = sphi 0, %s79
      %s82 = sphi 0, %s81
      %s96 = sphi 0, %s82
      %s100 = sphi 0, %s100
      %s102 = sphi 0, %s100
      %s103 = sphi 0, %s102
      %s117 = sphi 0, %s103
      %s123 = sphi 0, %s125
      %s126 = sphi 0, %s123
      %s127 = sphi 0, %s126
      %s143 = sphi 0, %s127
      %s149 = sphi 0, %s151
      %s152 = sphi 0, %s149
      %s153 = sphi 0, %s152
      %s169 = sphi 0, %s153
      %s175 = sphi 0, %s177
      %s178 = sphi 0, %s175
      %s179 = sphi 0, %s178
      %s195 = sphi 0, %s179
    $region4: #{inference_encoder_forward.1} parent=1 // loop_header_branch
      %15 = sbr.rel (%p13) target = $region8
    $region5: #{inference_encoder_forward.1} parent=1 // loop_body
      %s17 = ssub.s32 %s12, 1
      %s18 = ssub.s32 %s12, 2
      %s25 = sadd.s32 1, %s20
      %p26 = scmp.ge.s32.totalorder %s25, 2
      %s27 = scalar_select %p26, 0, %s25
      %s28 = sadd.s32 1, %s19
      %s29 = scalar_select %p26, %s28, %s19
      %p30 = scmp.ge.s32.totalorder %s29, 2
      %s31 = scalar_select %p30, 0, %s29
      %s32 = ssub.s32 %s19, %s31
      %p33 = scmp.eq.s32.totalorder %s32, 0
      %s35 = sadd.s32 %s34, 1
      %s36 = scalar_select %p33, %s34, %s35
      %p39 = pneg %p33
      %p40 = scmp.eq.s32.totalorder %s12, 3
      %p41 = por %p39, %p40
      %p42 = scmp.ne.s32.totalorder %s34, %s37
      %p43 = scmp.eq.s32.totalorder %s12, 0
      %p44 = por %p42, %p43
      %p45 = scmp.ne.s32.totalorder %s34, %s37
      %p46 = scmp.eq.s32.totalorder %s17, 3
      %p47 = por %p45, %p46
      %p48 = scmp.ne.s32.totalorder %s37, %s38
      %p49 = scmp.eq.s32.totalorder %s17, 0
      %p50 = por %p48, %p49
      %p51 = scmp.ne.s32.totalorder %s37, %s38
      %p52 = scmp.eq.s32.totalorder %s18, 3
      %p53 = por %p51, %p52
      %p55 = scmp.ne.s32.totalorder %s38, %s54
      %p56 = scmp.eq.s32.totalorder %s18, 0
      %p57 = por %p55, %p56
      %s59 = sadd.s32 %s58, 1
      %p62 = scmp.eq.s32.totalorder %s12, 3
      %p63 = scmp.ne.s32.totalorder %s58, %s60
      %p64 = scmp.eq.s32.totalorder %s12, 0
      %p65 = por %p63, %p64
      %p66 = scmp.ne.s32.totalorder %s58, %s60
      %p67 = scmp.eq.s32.totalorder %s17, 3
      %p68 = por %p66, %p67
      %p69 = scmp.ne.s32.totalorder %s60, %s61
      %p70 = scmp.eq.s32.totalorder %s17, 0
      %p71 = por %p69, %p70
      %p72 = scmp.ne.s32.totalorder %s60, %s61
      %p73 = scmp.eq.s32.totalorder %s18, 3
      %p74 = por %p72, %p73
      %p76 = scmp.ne.s32.totalorder %s61, %s75
      %p77 = scmp.eq.s32.totalorder %s18, 0
      %p78 = por %p76, %p77
      %s80 = sadd.s32 %s79, 1
      %p83 = scmp.eq.s32.totalorder %s12, 3
      %p84 = scmp.ne.s32.totalorder %s79, %s81
      %p85 = scmp.eq.s32.totalorder %s12, 0
      %p86 = por %p84, %p85
      %p87 = scmp.ne.s32.totalorder %s79, %s81
      %p88 = scmp.eq.s32.totalorder %s17, 3
      %p89 = por %p87, %p88
      %p90 = scmp.ne.s32.totalorder %s81, %s82
      %p91 = scmp.eq.s32.totalorder %s17, 0
      %p92 = por %p90, %p91
      %p93 = scmp.ne.s32.totalorder %s81, %s82
      %p94 = scmp.eq.s32.totalorder %s18, 3
      %p95 = por %p93, %p94
      %p97 = scmp.ne.s32.totalorder %s82, %s96
      %p98 = scmp.eq.s32.totalorder %s18, 0
      %p99 = por %p97, %p98
      %s101 = sadd.s32 %s100, 1
      %p104 = scmp.eq.s32.totalorder %s12, 3
      %p105 = scmp.ne.s32.totalorder %s100, %s102
      %p106 = scmp.eq.s32.totalorder %s12, 0
      %p107 = por %p105, %p106
      %p108 = scmp.ne.s32.totalorder %s100, %s102
      %p109 = scmp.eq.s32.totalorder %s17, 3
      %p110 = por %p108, %p109
      %p111 = scmp.ne.s32.totalorder %s102, %s103
      %p112 = scmp.eq.s32.totalorder %s17, 0
      %p113 = por %p111, %p112
      %p114 = scmp.ne.s32.totalorder %s102, %s103
      %p115 = scmp.eq.s32.totalorder %s18, 3
      %p116 = por %p114, %p115
      %p118 = scmp.ne.s32.totalorder %s103, %s117
      %p119 = scmp.eq.s32.totalorder %s18, 0
      %p120 = por %p118, %p119
      %s121 = ssub.s32 %s20, %s27
      %p122 = scmp.eq.s32.totalorder %s121, 0
      %s124 = sadd.s32 %s123, 1
      %s125 = scalar_select %p122, %s123, %s124
      %p128 = pneg %p122
      %p129 = scmp.eq.s32.totalorder %s12, 3
      %p130 = por %p128, %p129
      %p131 = scmp.ne.s32.totalorder %s123, %s126
      %p132 = scmp.eq.s32.totalorder %s12, 0
      %p133 = por %p131, %p132
      %p134 = scmp.ne.s32.totalorder %s123, %s126
      %p135 = scmp.eq.s32.totalorder %s17, 3
      %p136 = por %p134, %p135
      %p137 = scmp.ne.s32.totalorder %s126, %s127
      %p138 = scmp.eq.s32.totalorder %s17, 0
      %p139 = por %p137, %p138
      %p140 = scmp.ne.s32.totalorder %s126, %s127
      %p141 = scmp.eq.s32.totalorder %s18, 3
      %p142 = por %p140, %p141
      %p144 = scmp.ne.s32.totalorder %s127, %s143
      %p145 = scmp.eq.s32.totalorder %s18, 0
      %p146 = por %p144, %p145
      %s147 = ssub.s32 %s20, %s27
      %p148 = scmp.eq.s32.totalorder %s147, 0
      %s150 = sadd.s32 %s149, 1
      %s151 = scalar_select %p148, %s149, %s150
      %p154 = pneg %p148
      %p155 = scmp.eq.s32.totalorder %s12, 3
      %p156 = por %p154, %p155
      %p157 = scmp.ne.s32.totalorder %s149, %s152
      %p158 = scmp.eq.s32.totalorder %s12, 0
      %p159 = por %p157, %p158
      %p160 = scmp.ne.s32.totalorder %s149, %s152
      %p161 = scmp.eq.s32.totalorder %s17, 3
      %p162 = por %p160, %p161
      %p163 = scmp.ne.s32.totalorder %s152, %s153
      %p164 = scmp.eq.s32.totalorder %s17, 0
      %p165 = por %p163, %p164
      %p166 = scmp.ne.s32.totalorder %s152, %s153
      %p167 = scmp.eq.s32.totalorder %s18, 3
      %p168 = por %p166, %p167
      %p170 = scmp.ne.s32.totalorder %s153, %s169
      %p171 = scmp.eq.s32.totalorder %s18, 0
      %p172 = por %p170, %p171
      %s173 = ssub.s32 %s19, %s31
      %p174 = scmp.eq.s32.totalorder %s173, 0
      %s176 = sadd.s32 %s175, 1
      %s177 = scalar_select %p174, %s175, %s176
      %p180 = pneg %p174
      %p181 = scmp.eq.s32.totalorder %s12, 3
      %p182 = por %p180, %p181
      %p183 = scmp.ne.s32.totalorder %s175, %s178
      %p184 = scmp.eq.s32.totalorder %s12, 0
      %p185 = por %p183, %p184
      %p186 = scmp.ne.s32.totalorder %s175, %s178
      %p187 = scmp.eq.s32.totalorder %s17, 3
      %p188 = por %p186, %p187
      %p189 = scmp.ne.s32.totalorder %s178, %s179
      %p190 = scmp.eq.s32.totalorder %s17, 0
      %p191 = por %p189, %p190
      %p192 = scmp.ne.s32.totalorder %s178, %s179
      %p193 = scmp.eq.s32.totalorder %s18, 3
      %p194 = por %p192, %p193
      %p196 = scmp.ne.s32.totalorder %s179, %s195
      %p197 = scmp.eq.s32.totalorder %s18, 0
      %p198 = por %p196, %p197
      %p199 = scmp.le.s32.totalorder 1, %s12
      %p200 = scmp.lt.s32.totalorder %s12, 5
      %p201 = pnand %p199, %p200
      %p202 = pneg %p201
      // Predicated region
      $region9: #{inference_encoder_forward.1} parent=5 // pred_check
        _
      $region10: #{inference_encoder_forward.1} parent=5 // pred_check_branch
        %204 = sbr.rel (%p201) target = $region12
      $region11: #{inference_encoder_forward.1} parent=5 // pred_region
        %s205 = ssub.s32 %s12, 1
        // Predicated region
        $region13: #{inference_encoder_forward.1} parent=11 // pred_check
          %p206 = pneg %p71
        $region14: #{inference_encoder_forward.1} parent=11 // pred_check_branch
          %208 = sbr.rel (%p206) target = $region16
        $region15: #{inference_encoder_forward.1} parent=11 // pred_region
          _
        $region16: #{inference_encoder_forward.1} parent=11 // pred_fallthru
          _
        // Predicated region
        $region17: #{inference_encoder_forward.1} parent=11 // pred_check
          %p209 = pneg %p92
        $region18: #{inference_encoder_forward.1} parent=11 // pred_check_branch
          %211 = sbr.rel (%p209) target = $region20
        $region19: #{inference_encoder_forward.1} parent=11 // pred_region
          _
        $region20: #{inference_encoder_forward.1} parent=11 // pred_fallthru
          _
        // Predicated region
        $region21: #{inference_encoder_forward.1} parent=11 // pred_check
          %p212 = pneg %p113
        $region22: #{inference_encoder_forward.1} parent=11 // pred_check_branch
          %214 = sbr.rel (%p212) target = $region24
        $region23: #{inference_encoder_forward.1} parent=11 // pred_region
          _
        $region24: #{inference_encoder_forward.1} parent=11 // pred_fallthru
          _
      $region12: #{inference_encoder_forward.1} parent=5 // pred_fallthru
        _
      %p215 = scmp.lt.s32.totalorder %s12, 4
      // Predicated region
      $region25: #{inference_encoder_forward.1} parent=5 // pred_check
        %p216 = pneg %p215
      $region26: #{inference_encoder_forward.1} parent=5 // pred_check_branch
        %218 = sbr.rel (%p216) target = $region28
      $region27: #{inference_encoder_forward.1} parent=5 // pred_region
        // Predicated region
        $region29: #{inference_encoder_forward.1} parent=27 // pred_check
          %p219 = pneg %p44
        $region30: #{inference_encoder_forward.1} parent=27 // pred_check_branch
          %221 = sbr.rel (%p219) target = $region32
        $region31: #{inference_encoder_forward.1} parent=27 // pred_region
          %s222 = smul.u32 2, %s19
          %p223 = scmp.lt.s32.totalorder %s222, 3
          %s224 = scalar_select %p223, %s222, 3
          %s225 = smul.addr %s224, 4
          %s226 = scalar_lea.vmem %s0, %s225
          %s227 = smul.u32 2, %s19
        $region32: #{inference_encoder_forward.1} parent=27 // pred_fallthru
          _
        // Predicated region
        $region33: #{inference_encoder_forward.1} parent=27 // pred_check
          %p228 = pneg %p133
        $region34: #{inference_encoder_forward.1} parent=27 // pred_check_branch
          %230 = sbr.rel (%p228) target = $region36
        $region35: #{inference_encoder_forward.1} parent=27 // pred_region
          %s231 = sand.u32 %s123, 1
          %s232 = sand.u32 %s123, 1
          %s233 = smul.addr %s232, 64
          %s234 = scalar_lea.vmem [#allocation4], %s233
          %s235 = smul.addr %s20, 4
          %s236 = scalar_lea.vmem %s4, %s235
          // Predicated region
          $region37: #{inference_encoder_forward.1} parent=35 // pred_check
            _
          $region38: #{inference_encoder_forward.1} parent=35 // pred_check_branch
            %238 = sbr.rel (0) target = $region40
          $region39: #{inference_encoder_forward.1} parent=35 // pred_region
            // Predicated region
            $region41: #{inference_encoder_forward.1} parent=39 // pred_check
              _
            $region42: #{inference_encoder_forward.1} parent=39 // pred_check_branch
              %240 = sbr.rel target = $region44
            $region43: #{inference_encoder_forward.1} parent=39 // pred_region
              // Predicated region
              $region56: #{inference_encoder_forward.1} parent=43 // pred_check
                _
              $region57: #{inference_encoder_forward.1} parent=43 // pred_check_branch
                %285 = sbr.rel (0) target = $region59
              $region58: #{inference_encoder_forward.1} parent=43 // pred_region
                loop: start=0, step=1, limit=1
                $region60: #{inference_encoder_forward.1} parent=58 // loop_pre_header
                  _
                $region61: #{inference_encoder_forward.1} parent=58 // loop_header
                  %s287 = sphi 0, %s291
                  %p288 = scmp.ge.s32.totalorder %s287, 1
                  %s292 = sphi %s236, %s236
                  %s293 = sphi %s234, %s234
                $region62: #{inference_encoder_forward.1} parent=58 // loop_header_branch
                  %290 = sbr.rel (%p288) target = $region66
                $region63: #{inference_encoder_forward.1} parent=58 // loop_body
                  _
                $region64: #{inference_encoder_forward.1} parent=58 // loop_footer
                  %s291 = sadd.s32 1, %s287
                $region65: #{inference_encoder_forward.1} parent=58 // loop_footer_branch
                  %286 = sbr.rel target = $region61
                $region66: #{inference_encoder_forward.1} parent=58 // loop_exit
                  _
                loop: start=0, step=1, limit=1
                $region67: #{inference_encoder_forward.1} parent=58 // loop_pre_header
                  _
                $region68: #{inference_encoder_forward.1} parent=58 // loop_header
                  %s296 = sphi 0, %s300
                  %p297 = scmp.ge.s32.totalorder %s296, 1
                  %s301 = sphi %s236, %s236
                  %s302 = sphi %s234, %s234
                $region69: #{inference_encoder_forward.1} parent=58 // loop_header_branch
                  %299 = sbr.rel (%p297) target = $region73
                $region70: #{inference_encoder_forward.1} parent=58 // loop_body
                  %v303 = vld [vmem:[%s301] sm:$0xf]
                  %304 = vst [vmem:[%s302] sm:$0xf] %v303
                  %v305 = vld [vmem:[%s301 + $0x8] sm:$0xf]
                  %306 = vst [vmem:[%s302 + $0x4] sm:$0xf] %v305
                  %v307 = vld [vmem:[%s301 + $0x10] sm:$0xf]
                  %308 = vst [vmem:[%s302 + $0x8] sm:$0xf] %v307
                  %v309 = vld [vmem:[%s301 + $0x18] sm:$0xf]
                  %310 = vst [vmem:[%s302 + $0xc] sm:$0xf] %v309
                  %v311 = vld [vmem:[%s301 + $0x20] sm:$0xf]
                  %312 = vst [vmem:[%s302 + $0x10] sm:$0xf] %v311
                  %v313 = vld [vmem:[%s301 + $0x28] sm:$0xf]
                  %314 = vst [vmem:[%s302 + $0x14] sm:$0xf] %v313
                  %v315 = vld [vmem:[%s301 + $0x30] sm:$0xf]
                  %316 = vst [vmem:[%s302 + $0x18] sm:$0xf] %v315
                  %v317 = vld [vmem:[%s301 + $0x38] sm:$0xf]
                  %318 = vst [vmem:[%s302 + $0x1c] sm:$0xf] %v317
                  %v319 = vld [vmem:[%s301 + $0x40] sm:$0xf]
                  %320 = vst [vmem:[%s302 + $0x20] sm:$0xf] %v319
                  %v321 = vld [vmem:[%s301 + $0x48] sm:$0xf]
                  %322 = vst [vmem:[%s302 + $0x24] sm:$0xf] %v321
                  %v323 = vld [vmem:[%s301 + $0x50] sm:$0xf]
                  %324 = vst [vmem:[%s302 + $0x28] sm:$0xf] %v323
                  %v325 = vld [vmem:[%s301 + $0x58] sm:$0xf]
                  %326 = vst [vmem:[%s302 + $0x2c] sm:$0xf] %v325
                  %v327 = vld [vmem:[%s301 + $0x60] sm:$0xf]
                  %328 = vst [vmem:[%s302 + $0x30] sm:$0xf] %v327
                  %v329 = vld [vmem:[%s301 + $0x68] sm:$0xf]
                  %330 = vst [vmem:[%s302 + $0x34] sm:$0xf] %v329
                  %v331 = vld [vmem:[%s301 + $0x70] sm:$0xf]
                  %332 = vst [vmem:[%s302 + $0x38] sm:$0xf] %v331
                  %v333 = vld [vmem:[%s301 + $0x78] sm:$0xf]
                  %334 = vst [vmem:[%s302 + $0x3c] sm:$0xf] %v333
                $region71: #{inference_encoder_forward.1} parent=58 // loop_footer
                  %s300 = sadd.s32 1, %s296
                $region72: #{inference_encoder_forward.1} parent=58 // loop_footer_branch
                  %295 = sbr.rel target = $region68
                $region73: #{inference_encoder_forward.1} parent=58 // loop_exit
                  _
              $region59: #{inference_encoder_forward.1} parent=43 // pred_fallthru
                _
            $region44: #{inference_encoder_forward.1} parent=39 // pred_fallthru
              _
            // Predicated region
            $region45: #{inference_encoder_forward.1} parent=39 // pred_check
              _
            $region46: #{inference_encoder_forward.1} parent=39 // pred_check_branch
              %242 = sbr.rel (0) target = $region48
            $region47: #{inference_encoder_forward.1} parent=39 // pred_region
              loop: start=0, step=1, limit=1
              $region49: #{inference_encoder_forward.1} parent=47 // loop_pre_header
                _
              $region50: #{inference_encoder_forward.1} parent=47 // loop_header
                %s245 = sphi 0, %s249
                %p246 = scmp.ge.s32.totalorder %s245, 1
                %s250 = sphi %s236, %s236
                %s251 = sphi %s234, %s234
              $region51: #{inference_encoder_forward.1} parent=47 // loop_header_branch
                %248 = sbr.rel (%p246) target = $region55
              $region52: #{inference_encoder_forward.1} parent=47 // loop_body
                %v252 = vld [vmem:[%s250] sm:$0xf]
                %253 = vst [vmem:[%s251] sm:$0xf] %v252
                %v254 = vld [vmem:[%s250 + $0x8] sm:$0xf]
                %255 = vst [vmem:[%s251 + $0x4] sm:$0xf] %v254
                %v256 = vld [vmem:[%s250 + $0x10] sm:$0xf]
                %257 = vst [vmem:[%s251 + $0x8] sm:$0xf] %v256
                %v258 = vld [vmem:[%s250 + $0x18] sm:$0xf]
                %259 = vst [vmem:[%s251 + $0xc] sm:$0xf] %v258
                %v260 = vld [vmem:[%s250 + $0x20] sm:$0xf]
                %261 = vst [vmem:[%s251 + $0x10] sm:$0xf] %v260
                %v262 = vld [vmem:[%s250 + $0x28] sm:$0xf]
                %263 = vst [vmem:[%s251 + $0x14] sm:$0xf] %v262
                %v264 = vld [vmem:[%s250 + $0x30] sm:$0xf]
                %265 = vst [vmem:[%s251 + $0x18] sm:$0xf] %v264
                %v266 = vld [vmem:[%s250 + $0x38] sm:$0xf]
                %267 = vst [vmem:[%s251 + $0x1c] sm:$0xf] %v266
                %v268 = vld [vmem:[%s250 + $0x40] sm:$0xf]
                %269 = vst [vmem:[%s251 + $0x20] sm:$0xf] %v268
                %v270 = vld [vmem:[%s250 + $0x48] sm:$0xf]
                %271 = vst [vmem:[%s251 + $0x24] sm:$0xf] %v270
                %v272 = vld [vmem:[%s250 + $0x50] sm:$0xf]
                %273 = vst [vmem:[%s251 + $0x28] sm:$0xf] %v272
                %v274 = vld [vmem:[%s250 + $0x58] sm:$0xf]
                %275 = vst [vmem:[%s251 + $0x2c] sm:$0xf] %v274
                %v276 = vld [vmem:[%s250 + $0x60] sm:$0xf]
                %277 = vst [vmem:[%s251 + $0x30] sm:$0xf] %v276
                %v278 = vld [vmem:[%s250 + $0x68] sm:$0xf]
                %279 = vst [vmem:[%s251 + $0x34] sm:$0xf] %v278
                %v280 = vld [vmem:[%s250 + $0x70] sm:$0xf]
                %281 = vst [vmem:[%s251 + $0x38] sm:$0xf] %v280
                %v282 = vld [vmem:[%s250 + $0x78] sm:$0xf]
                %283 = vst [vmem:[%s251 + $0x3c] sm:$0xf] %v282
              $region53: #{inference_encoder_forward.1} parent=47 // loop_footer
                %s249 = sadd.s32 1, %s245
              $region54: #{inference_encoder_forward.1} parent=47 // loop_footer_branch
                %244 = sbr.rel target = $region50
              $region55: #{inference_encoder_forward.1} parent=47 // loop_exit
                _
            $region48: #{inference_encoder_forward.1} parent=39 // pred_fallthru
              _
          $region40: #{inference_encoder_forward.1} parent=35 // pred_fallthru
            _
          %335 = vnop
        $region36: #{inference_encoder_forward.1} parent=27 // pred_fallthru
          _
        // Predicated region
        $region74: #{inference_encoder_forward.1} parent=27 // pred_check
          %p336 = pneg %p159
        $region75: #{inference_encoder_forward.1} parent=27 // pred_check_branch
          %338 = sbr.rel (%p336) target = $region77
        $region76: #{inference_encoder_forward.1} parent=27 // pred_region
          %s339 = smul.u32 16, %s20
          %p340 = scmp.lt.s32.totalorder %s339, 31
          %s341 = scalar_select %p340, %s339, 31
          %s342 = smul.addr %s341, 4
          %s343 = scalar_lea.vmem %s5, %s342
          %s344 = smul.u32 16, %s20
        $region77: #{inference_encoder_forward.1} parent=27 // pred_fallthru
          _
      $region28: #{inference_encoder_forward.1} parent=5 // pred_fallthru
        _
      %p345 = scmp.le.s32.totalorder 1, %s12
      %p346 = scmp.lt.s32.totalorder %s12, 5
      %p347 = pnand %p345, %p346
      %p348 = pneg %p347
      // Predicated region
      $region78: #{inference_encoder_forward.1} parent=5 // pred_check
        _
      $region79: #{inference_encoder_forward.1} parent=5 // pred_check_branch
        %350 = sbr.rel (%p347) target = $region81
      $region80: #{inference_encoder_forward.1} parent=5 // pred_region
        %s351 = ssub.s32 %s12, 1
        %s352 = sand.u32 %s126, 1
        %s353 = sand.u32 %s126, 1
        %s354 = smul.addr %s353, 64
        %s355 = scalar_lea.vmem [#allocation4], %s354
        // Predicated region
        $region82: #{inference_encoder_forward.1} parent=80 // pred_check
          %p356 = pneg %p139
        $region83: #{inference_encoder_forward.1} parent=80 // pred_check_branch
          %358 = sbr.rel (%p356) target = $region85
        $region84: #{inference_encoder_forward.1} parent=80 // pred_region
          _
        $region85: #{inference_encoder_forward.1} parent=80 // pred_fallthru
          _
        %s359 = smul.u32 2, %s21
        %p360 = scmp.lt.s32.totalorder %s359, 3
        %s361 = scalar_select %p360, %s359, 3
        %s362 = smul.addr %s361, 4
        %s363 = scalar_lea.vmem %s0, %s362
        %p364 = pneg %p50
        %p365 = pneg %p47
        %p366 = pneg %p71
        %p367 = pneg %p68
        %p368 = pneg %p92
        %p369 = pneg %p89
        %p370 = pneg %p113
        %p371 = pneg %p110
        %s372 = sand.u32 %s126, 1
        %s373 = sand.u32 %s126, 1
        %s374 = smul.addr %s373, 64
        %s375 = scalar_lea.vmem [#allocation4], %s374
        %p376 = pneg %p139
        %p377 = pneg %p136
        %s378 = smul.u32 16, %s22
        %p379 = scmp.lt.s32.totalorder %s378, 31
        %s380 = scalar_select %p379, %s378, 31
        %s381 = smul.addr %s380, 4
        %s382 = scalar_lea.vmem %s5, %s381
        %p383 = pneg %p165
        %p384 = pneg %p162
        %p385 = pneg %p191
        %p386 = pneg %p188
        %s387 = smul.u32 2, %s21
        %p388 = scmp.lt.s32.totalorder %s387, 3
        %s389 = scalar_select %p388, %s387, 3
        %s390 = smul.addr %s389, 4
        %s391 = scalar_lea.vmem %s6, %s390
        %s392 = smul.u32 2, %s21
        %p393 = scmp.lt.s32.totalorder %s392, 3
        %s394 = scalar_select %p393, %s392, 3
        %s395 = smul.addr %s394, 4
        %s396 = scalar_lea.vmem %s0, %s395
        %s397 = smul.u32 2, %s21
        %s398 = smul.u32 16, %s22
        %p399 = scmp.lt.s32.totalorder %s398, 31
        %s400 = scalar_select %p399, %s398, 31
        %s401 = smul.addr %s400, 4
        %s402 = scalar_lea.vmem %s5, %s401
        %s403 = smul.u32 16, %s22
        %s404 = smul.u32 2, %s21
        %p405 = scmp.lt.s32.totalorder %s404, 3
        %s406 = scalar_select %p405, %s404, 3
        %s407 = smul.addr %s406, 4
        %s408 = scalar_lea.vmem %s6, %s407
        %s409 = smul.u32 2, %s21
        %p411 = scmp.eq.s32.totalorder %s22, 0
        // Predicated region
        $region86: #{inference_encoder_forward.1} parent=80 // pred_check
          %p412 = pneg %p411
        $region87: #{inference_encoder_forward.1} parent=80 // pred_check_branch
          %414 = sbr.rel (%p412) target = $region89
        $region88: #{inference_encoder_forward.1} parent=80 // pred_region
          %v415 = vld [vmem:[%s396] sm:$0xf]
          %v416 = vld [vmem:[%s396 + $0x4] sm:$0xf]
          %v417 = vld [vmem:[%s1] sm:$0xf]
          %v418 = vld [vmem:[%s1 + $0x4] sm:$0xf]
          %v419 = vld [vmem:[%s1 + $0x8] sm:$0xf]
          %v420 = vld [vmem:[%s1 + $0xc] sm:$0xf]
          %v421 = vld [vmem:[%s1 + $0x10] sm:$0xf]
          %v422 = vld [vmem:[%s1 + $0x14] sm:$0xf]
          %v423 = vld [vmem:[%s1 + $0x18] sm:$0xf]
          %v424 = vld [vmem:[%s1 + $0x1c] sm:$0xf]
          %v425 = vld [vmem:[%s1 + $0x20] sm:$0xf]
          %v426 = vld [vmem:[%s1 + $0x24] sm:$0xf]
          %v427 = vld [vmem:[%s1 + $0x28] sm:$0xf]
          %v428 = vld [vmem:[%s1 + $0x2c] sm:$0xf]
          %v429 = vld [vmem:[%s1 + $0x30] sm:$0xf]
          %v430 = vld [vmem:[%s1 + $0x34] sm:$0xf]
          %v431 = vld [vmem:[%s1 + $0x38] sm:$0xf]
          %v432 = vld [vmem:[%s1 + $0x3c] sm:$0xf]
          %v433 = vld [vmem:[%s2] sm:$0x1]
          %v434 = vlaneseq
          %v435 = vshrl.u32 %v434, 7
          %v436 = vsub.s32 0, %v435
          %v437 = vrot.slane %v433, %v436
          %v440 = vunpack.c.l.b16 %v415
          %v441 = vunpack.c.l.b16 %v416
          %v442 = vpack.c.b16 %v441, %v440
          %v460 = vunpack.c.l.b16 %v417
          %v461 = vunpack.c.l.b16 %v418
          %v462 = vunpack.c.l.b16 %v419
          %v463 = vunpack.c.l.b16 %v420
          %v464 = vunpack.c.l.b16 %v421
          %v465 = vunpack.c.l.b16 %v422
          %v466 = vunpack.c.l.b16 %v423
          %v467 = vunpack.c.l.b16 %v424
          %v468 = vunpack.c.l.b16 %v425
          %v469 = vunpack.c.l.b16 %v426
          %v470 = vunpack.c.l.b16 %v427
          %v471 = vunpack.c.l.b16 %v428
          %v472 = vunpack.c.l.b16 %v429
          %v473 = vunpack.c.l.b16 %v430
          %v474 = vunpack.c.l.b16 %v431
          %v475 = vunpack.c.l.b16 %v432
          %v476 = vpack.c.b16 %v461, %v460
          %v477 = vpack.c.b16 %v463, %v462
          %v478 = vpack.c.b16 %v465, %v464
          %v479 = vpack.c.b16 %v467, %v466
          %v480 = vpack.c.b16 %v469, %v468
          %v481 = vpack.c.b16 %v471, %v470
          %v482 = vpack.c.b16 %v473, %v472
          %v483 = vpack.c.b16 %v475, %v474
          %492 = vmatprep.subr.bf16.mxu0 0
          %493 = vmatpush1.bf16.msra.mxu0 %v476
          %494 = vmatprep.subr.bf16.mxu0 0
          %495 = vmatpush1.bf16.msra.mxu0 %v477
          %496 = vmatprep.subr.bf16.mxu0 0
          %497 = vmatpush1.bf16.msra.mxu0 %v478
          %498 = vmatprep.subr.bf16.mxu0 0
          %499 = vmatpush1.bf16.msra.mxu0 %v479
          %500 = vmatprep.subr.bf16.mxu0 0
          %501 = vmatpush1.bf16.msra.mxu0 %v480
          %502 = vmatprep.subr.bf16.mxu0 0
          %503 = vmatpush1.bf16.msra.mxu0 %v481
          %504 = vmatprep.subr.bf16.mxu0 0
          %505 = vmatpush1.bf16.msra.mxu0 %v482
          %506 = vmatprep.subr.bf16.mxu0 0
          %507 = vmatpush1.bf16.msra.mxu0 %v483
          %508 = vmatprep.subr.bf16.mxu0 0
          %509 = vmatpush1.bf16.msra.mxu0 0
          %510 = vmatprep.subr.bf16.mxu0 0
          %511 = vmatpush1.bf16.msra.mxu0 0
          %512 = vmatprep.subr.bf16.mxu0 0
          %513 = vmatpush1.bf16.msra.mxu0 0
          %514 = vmatprep.subr.bf16.mxu0 0
          %515 = vmatpush1.bf16.msra.mxu0 0
          %516 = vmatprep.subr.bf16.mxu0 0
          %517 = vmatpush1.bf16.msra.mxu0 0
          %518 = vmatprep.subr.bf16.mxu0 0
          %519 = vmatpush1.bf16.msra.mxu0 0
          %520 = vmatprep.subr.bf16.mxu0 0
          %521 = vmatpush1.bf16.msra.mxu0 0
          %522 = vmatprep.subr.bf16.mxu0 0
          %523 = vmatpush1.bf16.msra.mxu0 0
          %524 = vmatprep.mubr.bf16.mxu0 0
          %525 = vmatmul.mubr.bf16.gmra.mrb[0].mxu0 %v442
          %v526 = vpop.f32.mrb[0].mxu0
          %v527 = vadd.f32 %v437, %v526
          %v528 = vpop.f32.mrb[0].mxu0
          %v529 = vpop.f32.mrb[0].mxu0
          %v530 = vadd.f32 %v437, %v529
          %v531 = vpop.f32.mrb[0].mxu0
          %532 = vdwg.mxu0
          %533 = vadd.xlane.f32.xlu0 %v527
          %v534 = vpop.xlane.xlu0 %533
          %535 = vadd.xlane.f32.xlu0 %v530
          %v536 = vpop.xlane.xlu0 %535
          %v537 = vmul.f32 %v534, 0.03125
          %v538 = vmul.f32 %v536, 0.03125
          %v539 = vmul.f32 %v527, %v527
          %v540 = vmul.f32 %v530, %v530
          %541 = vadd.xlane.f32.xlu0 %v539
          %v542 = vpop.xlane.xlu0 %541
          %543 = vadd.xlane.f32.xlu0 %v540
          %v544 = vpop.xlane.xlu0 %543
          %v545 = vmul.f32 %v542, 0.03125
          %v546 = vmul.f32 %v544, 0.03125
          %v547 = vmul.f32 %v537, %v537
          %v548 = vmul.f32 %v538, %v538
          %v549 = vsub.f32 %v545, %v547
          %v550 = vsub.f32 %v546, %v548
          %v551 = vmax.f32 %v549, 0.0
          %v552 = vmax.f32 %v550, 0.0
          %v553 = vsub.f32 %v527, %v537
          %v554 = vsub.f32 %v530, %v538
          %v555 = vadd.f32 %v551, 1e-05
          %v556 = vadd.f32 %v552, 1e-05
          %v557 = vrsqrt.pop %v555
          %v558 = vrsqrt.pop %v556
          %v559 = vmul.f32 %v553, %v557
          %v560 = vmul.f32 %v554, %v558
          %v561 = vld [vmem:[%s2 + $0x1] sm:$0x1]
          %v562 = vlaneseq
          %v563 = vshrl.u32 %v562, 7
          %v564 = vsub.s32 0, %v563
          %v565 = vrot.slane %v561, %v564
          %v566 = vmul.f32 %v559, %v565
          %v567 = vmul.f32 %v560, %v565
          %v568 = vld [vmem:[%s2 + $0x2] sm:$0x1]
          %v569 = vlaneseq
          %v570 = vshrl.u32 %v569, 7
          %v571 = vsub.s32 0, %v570
          %v572 = vrot.slane %v568, %v571
          %v573 = vadd.f32 %v566, %v572
          %v574 = vadd.f32 %v567, %v572
          %v575 = vpack.c.bf16 %v574, %v573
          %576 = vst [vmem:[#allocation2] sm:$0xff] %v575
          %v577 = vld [vmem:[%s2 + $0x3] sm:$0x1]
          %v578 = vlaneseq
          %v579 = vshrl.u32 %v578, 7
          %v580 = vsub.s32 0, %v579
          %v581 = vrot.slane %v577, %v580
          %v582 = vadd.f32 %v573, %v581
          %v583 = vadd.f32 %v574, %v581
          %584 = vst [vmem:[#allocation3] sm:$0xff] %v582
          %585 = vst [vmem:[#allocation3 + $0x8] sm:$0xff] %v583
        $region89: #{inference_encoder_forward.1} parent=80 // pred_fallthru
          _
        %v586 = vld [vmem:[#allocation2] sm:$0xff]
        %v587 = vld [vmem:[%s355] sm:$0xf]
        %v588 = vld [vmem:[%s355 + $0x4] sm:$0xf]
        %v589 = vld [vmem:[%s355 + $0x8] sm:$0xf]
        %v590 = vld [vmem:[%s355 + $0xc] sm:$0xf]
        %v591 = vld [vmem:[%s355 + $0x10] sm:$0xf]
        %v592 = vld [vmem:[%s355 + $0x14] sm:$0xf]
        %v593 = vld [vmem:[%s355 + $0x18] sm:$0xf]
        %v594 = vld [vmem:[%s355 + $0x1c] sm:$0xf]
        %v595 = vld [vmem:[%s355 + $0x20] sm:$0xf]
        %v596 = vld [vmem:[%s355 + $0x24] sm:$0xf]
        %v597 = vld [vmem:[%s355 + $0x28] sm:$0xf]
        %v598 = vld [vmem:[%s355 + $0x2c] sm:$0xf]
        %v599 = vld [vmem:[%s355 + $0x30] sm:$0xf]
        %v600 = vld [vmem:[%s355 + $0x34] sm:$0xf]
        %v601 = vld [vmem:[%s355 + $0x38] sm:$0xf]
        %v602 = vld [vmem:[%s355 + $0x3c] sm:$0xf]
        %s603 = scalar_lea.vmem %s3, %s22
        %v604 = vld [vmem:[%s603] sm:$0x1]
        %v606 = vlaneseq
        %v607 = vshrl.u32 %v606, 7
        %v608 = vsub.s32 0, %v607
        %v609 = vrot.slane %v604, %v608
        %v627 = vunpack.c.l.b16 %v587
        %v628 = vunpack.c.l.b16 %v588
        %v629 = vunpack.c.l.b16 %v589
        %v630 = vunpack.c.l.b16 %v590
        %v631 = vunpack.c.l.b16 %v591
        %v632 = vunpack.c.l.b16 %v592
        %v633 = vunpack.c.l.b16 %v593
        %v634 = vunpack.c.l.b16 %v594
        %v635 = vunpack.c.l.b16 %v595
        %v636 = vunpack.c.l.b16 %v596
        %v637 = vunpack.c.l.b16 %v597
        %v638 = vunpack.c.l.b16 %v598
        %v639 = vunpack.c.l.b16 %v599
        %v640 = vunpack.c.l.b16 %v600
        %v641 = vunpack.c.l.b16 %v601
        %v642 = vunpack.c.l.b16 %v602
        %v643 = vpack.c.b16 %v628, %v627
        %v644 = vpack.c.b16 %v630, %v629
        %v645 = vpack.c.b16 %v632, %v631
        %v646 = vpack.c.b16 %v634, %v633
        %v647 = vpack.c.b16 %v636, %v635
        %v648 = vpack.c.b16 %v638, %v637
        %v649 = vpack.c.b16 %v640, %v639
        %v650 = vpack.c.b16 %v642, %v641
        %659 = vmatprep.subr.bf16.mxu0 0
        %660 = vmatpush1.bf16.msra.mxu0 %v643
        %661 = vmatprep.subr.bf16.mxu0 0
        %662 = vmatpush1.bf16.msra.mxu0 %v644
        %663 = vmatprep.subr.bf16.mxu0 0
        %664 = vmatpush1.bf16.msra.mxu0 %v645
        %665 = vmatprep.subr.bf16.mxu0 0
        %666 = vmatpush1.bf16.msra.mxu0 %v646
        %667 = vmatprep.subr.bf16.mxu0 0
        %668 = vmatpush1.bf16.msra.mxu0 %v647
        %669 = vmatprep.subr.bf16.mxu0 0
        %670 = vmatpush1.bf16.msra.mxu0 %v648
        %671 = vmatprep.subr.bf16.mxu0 0
        %672 = vmatpush1.bf16.msra.mxu0 %v649
        %673 = vmatprep.subr.bf16.mxu0 0
        %674 = vmatpush1.bf16.msra.mxu0 %v650
        %675 = vmatprep.subr.bf16.mxu0 0
        %676 = vmatpush1.bf16.msra.mxu0 0
        %677 = vmatprep.subr.bf16.mxu0 0
        %678 = vmatpush1.bf16.msra.mxu0 0
        %679 = vmatprep.subr.bf16.mxu0 0
        %680 = vmatpush1.bf16.msra.mxu0 0
        %681 = vmatprep.subr.bf16.mxu0 0
        %682 = vmatpush1.bf16.msra.mxu0 0
        %683 = vmatprep.subr.bf16.mxu0 0
        %684 = vmatpush1.bf16.msra.mxu0 0
        %685 = vmatprep.subr.bf16.mxu0 0
        %686 = vmatpush1.bf16.msra.mxu0 0
        %687 = vmatprep.subr.bf16.mxu0 0
        %688 = vmatpush1.bf16.msra.mxu0 0
        %689 = vmatprep.subr.bf16.mxu0 0
        %690 = vmatpush1.bf16.msra.mxu0 0
        %691 = vmatprep.mubr.bf16.mxu0 0
        %692 = vmatmul.mubr.bf16.gmra.mrb[0].mxu0 %v586
        %v693 = vpop.f32.mrb[0].mxu0
        %v694 = vadd.f32 %v609, %v693
        %v695 = vpop.f32.mrb[0].mxu0
        %v696 = vpop.f32.mrb[0].mxu0
        %v697 = vadd.f32 %v609, %v696
        %v698 = vpop.f32.mrb[0].mxu0
        %699 = vdwg.mxu0
        %v700 = vmul.f32 %v694, %v694
        %v701 = vmul.f32 %v697, %v697
        %v702 = vmul.f32 %v694, %v700
        %v703 = vmul.f32 %v697, %v701
        %v704 = vmul.f32 %v702, 0.044715
        %v705 = vmul.f32 %v703, 0.044715
        %v706 = vadd.f32 %v694, %v704
        %v707 = vadd.f32 %v697, %v705
        %v708 = vmul.f32 %v706, 0.7978846
        %v709 = vmul.f32 %v707, 0.7978846
        %v710 = vtanh.pop %v708
        %v711 = vtanh.pop %v709
        %v712 = vadd.f32 %v710, 1.0
        %v713 = vadd.f32 %v711, 1.0
        %v714 = vmul.f32 %v712, 0.5
        %v715 = vmul.f32 %v713, 0.5
        %v716 = vmul.f32 %v694, %v714
        %v717 = vmul.f32 %v697, %v715
        %v718 = vld [vmem:[#allocation3] sm:$0xff]
        %v719 = vld [vmem:[#allocation3 + $0x8] sm:$0xff]
        %v720 = vpack.c.bf16 %v717, %v716
        %v721 = vld [vmem:[%s402] sm:$0xf]
        %v722 = vld [vmem:[%s402 + $0x4] sm:$0xf]
        %v723 = vld [vmem:[%s402 + $0x8] sm:$0xf]
        %v724 = vld [vmem:[%s402 + $0xc] sm:$0xf]
        %v725 = vld [vmem:[%s402 + $0x10] sm:$0xf]
        %v726 = vld [vmem:[%s402 + $0x14] sm:$0xf]
        %v727 = vld [vmem:[%s402 + $0x18] sm:$0xf]
        %v728 = vld [vmem:[%s402 + $0x1c] sm:$0xf]
        %v729 = vld [vmem:[%s402 + $0x20] sm:$0xf]
        %v730 = vld [vmem:[%s402 + $0x24] sm:$0xf]
        %v731 = vld [vmem:[%s402 + $0x28] sm:$0xf]
        %v732 = vld [vmem:[%s402 + $0x2c] sm:$0xf]
        %v733 = vld [vmem:[%s402 + $0x30] sm:$0xf]
        %v734 = vld [vmem:[%s402 + $0x34] sm:$0xf]
        %v735 = vld [vmem:[%s402 + $0x38] sm:$0xf]
        %v736 = vld [vmem:[%s402 + $0x3c] sm:$0xf]
        %v753 = vunpack.c.l.b16 %v721
        %v754 = vunpack.c.l.b16 %v722
        %v755 = vunpack.c.l.b16 %v723
        %v756 = vunpack.c.l.b16 %v724
        %v757 = vunpack.c.l.b16 %v725
        %v758 = vunpack.c.l.b16 %v726
        %v759 = vunpack.c.l.b16 %v727
        %v760 = vunpack.c.l.b16 %v728
        %v761 = vunpack.c.l.b16 %v729
        %v762 = vunpack.c.l.b16 %v730
        %v763 = vunpack.c.l.b16 %v731
        %v764 = vunpack.c.l.b16 %v732
        %v765 = vunpack.c.l.b16 %v733
        %v766 = vunpack.c.l.b16 %v734
        %v767 = vunpack.c.l.b16 %v735
        %v768 = vunpack.c.l.b16 %v736
        %v769 = vpack.c.b16 %v754, %v753
        %v770 = vpack.c.b16 %v756, %v755
        %v771 = vpack.c.b16 %v758, %v757
        %v772 = vpack.c.b16 %v760, %v759
        %v773 = vpack.c.b16 %v762, %v761
        %v774 = vpack.c.b16 %v764, %v763
        %v775 = vpack.c.b16 %v766, %v765
        %v776 = vpack.c.b16 %v768, %v767
        %785 = vmatprep.subr.bf16.mxu0 0
        %786 = vmatpush1.bf16.msra.mxu0 %v769
        %787 = vmatprep.subr.bf16.mxu0 0
        %788 = vmatpush1.bf16.msra.mxu0 %v770
        %789 = vmatprep.subr.bf16.mxu0 0
        %790 = vmatpush1.bf16.msra.mxu0 %v771
        %791 = vmatprep.subr.bf16.mxu0 0
        %792 = vmatpush1.bf16.msra.mxu0 %v772
        %793 = vmatprep.subr.bf16.mxu0 0
        %794 = vmatpush1.bf16.msra.mxu0 %v773
        %795 = vmatprep.subr.bf16.mxu0 0
        %796 = vmatpush1.bf16.msra.mxu0 %v774
        %797 = vmatprep.subr.bf16.mxu0 0
        %798 = vmatpush1.bf16.msra.mxu0 %v775
        %799 = vmatprep.subr.bf16.mxu0 0
        %800 = vmatpush1.bf16.msra.mxu0 %v776
        %801 = vmatprep.subr.bf16.mxu0 0
        %802 = vmatpush1.bf16.msra.mxu0 0
        %803 = vmatprep.subr.bf16.mxu0 0
        %804 = vmatpush1.bf16.msra.mxu0 0
        %805 = vmatprep.subr.bf16.mxu0 0
        %806 = vmatpush1.bf16.msra.mxu0 0
        %807 = vmatprep.subr.bf16.mxu0 0
        %808 = vmatpush1.bf16.msra.mxu0 0
        %809 = vmatprep.subr.bf16.mxu0 0
        %810 = vmatpush1.bf16.msra.mxu0 0
        %811 = vmatprep.subr.bf16.mxu0 0
        %812 = vmatpush1.bf16.msra.mxu0 0
        %813 = vmatprep.subr.bf16.mxu0 0
        %814 = vmatpush1.bf16.msra.mxu0 0
        %815 = vmatprep.subr.bf16.mxu0 0
        %816 = vmatpush1.bf16.msra.mxu0 0
        %817 = vmatprep.mubr.bf16.mxu0 0
        %818 = vmatmul.mubr.bf16.gmra.mrb[0].mxu0 %v720
        %v819 = vpop.f32.mrb[0].mxu0
        %v820 = vadd.f32 0.0, %v819
        %v821 = vpop.f32.mrb[0].mxu0
        %v822 = vpop.f32.mrb[0].mxu0
        %v823 = vadd.f32 0.0, %v822
        %v824 = vpop.f32.mrb[0].mxu0
        %825 = vdwg.mxu0
        %v826 = vadd.f32 %v718, %v820
        %v827 = vadd.f32 %v719, %v823
        %828 = vst [vmem:[#allocation3] sm:$0xff] %v826
        %829 = vst [vmem:[#allocation3 + $0x8] sm:$0xff] %v827
        %p830 = scmp.eq.s32.totalorder %s22, 1
        // Predicated region
        $region90: #{inference_encoder_forward.1} parent=80 // pred_check
          %p831 = pneg %p830
        $region91: #{inference_encoder_forward.1} parent=80 // pred_check_branch
          %833 = sbr.rel (%p831) target = $region93
        $region92: #{inference_encoder_forward.1} parent=80 // pred_region
          %v834 = vld [vmem:[#allocation3] sm:$0xff]
          %v835 = vld [vmem:[#allocation3 + $0x8] sm:$0xff]
          %v836 = vpack.c.bf16 %v835, %v834
          %v838 = vunpack.c.l.b16 %v836
          %v839 = vunpack.c.h.b16 %v836
          %v840 = vpack.c.b16 %v838, %v838
          %v841 = vpack.c.b16 %v839, %v839
          %844 = vst [vmem:[%s408] sm:$0xf] %v840
          %845 = vst [vmem:[%s408 + $0x4] sm:$0xf] %v841
        $region93: #{inference_encoder_forward.1} parent=80 // pred_fallthru
          _
        %s846 = smul.u32 2, %s21
        %p847 = scmp.lt.s32.totalorder %s846, 3
        %s848 = scalar_select %p847, %s846, 3
        %s849 = smul.addr %s848, 4
        %s850 = scalar_lea.vmem %s6, %s849
        // Predicated region
        $region94: #{inference_encoder_forward.1} parent=80 // pred_check
          %p851 = pneg %p188
        $region95: #{inference_encoder_forward.1} parent=80 // pred_check_branch
          %853 = sbr.rel (%p851) target = $region97
        $region96: #{inference_encoder_forward.1} parent=80 // pred_region
          %s854 = smul.u32 2, %s21
        $region97: #{inference_encoder_forward.1} parent=80 // pred_fallthru
          _
      $region81: #{inference_encoder_forward.1} parent=5 // pred_fallthru
        _
      %p855 = scmp.le.s32.totalorder 2, %s12
      // Predicated region
      $region98: #{inference_encoder_forward.1} parent=5 // pred_check
        %p856 = pneg %p855
      $region99: #{inference_encoder_forward.1} parent=5 // pred_check_branch
        %858 = sbr.rel (%p856) target = $region101
      $region100: #{inference_encoder_forward.1} parent=5 // pred_region
        %s859 = ssub.s32 %s12, 2
        // Predicated region
        $region102: #{inference_encoder_forward.1} parent=100 // pred_check
          %p860 = pneg %p194
        $region103: #{inference_encoder_forward.1} parent=100 // pred_check_branch
          %862 = sbr.rel (%p860) target = $region105
        $region104: #{inference_encoder_forward.1} parent=100 // pred_region
          %s863 = smul.u32 2, %s23
          %p864 = scmp.lt.s32.totalorder %s863, 3
          %s865 = scalar_select %p864, %s863, 3
          %s866 = smul.addr %s865, 4
          %s867 = scalar_lea.vmem %s6, %s866
        $region105: #{inference_encoder_forward.1} parent=100 // pred_fallthru
          _
      $region101: #{inference_encoder_forward.1} parent=5 // pred_fallthru
        _
    $region6: #{inference_encoder_forward.1} parent=1 // loop_footer
      %s16 = sadd.s32 1, %s12
    $region7: #{inference_encoder_forward.1} parent=1 // loop_footer_branch
      %11 = sbr.rel target = $region3
    $region8: #{inference_encoder_forward.1} parent=1 // loop_exit
      _

</llo_original>
